<compile_context>
chip_gen: v7x
topology: tpu7x:2x2x1
jax: 0.10.0
libtpu: 0.0.40
codegen_flags: <defaults>
</compile_context>

<pallas_src>
import jax
import jax.numpy as jnp
from jax.experimental import pallas as pl
from jax.experimental.pallas import tpu as pltpu


# -----------------------------------------------------------------------------
# Fused Pallas kernel: whole 3-layer G_ResNet forward in VMEM.
# -----------------------------------------------------------------------------
def _g_resnet_kernel(a_ref, x_ref, w0_ref, w1_ref, w2a_ref, w2b_ref, b_ref,
                     out_ref):
    c0 = w0_ref.shape[1]          # 16
    c1 = w1_ref.shape[1]          # 32
    c2 = out_ref.shape[1]         # 16
    bf16 = jnp.bfloat16
    f32 = jnp.float32

    a = a_ref[...]                                                   # (N, N) bf16

    # ---- layer 0: GCNConv(8 -> 16); C_in < C_out so contract C_in first ----
    ax = jnp.dot(a, x_ref[...], preferred_element_type=f32)          # (N, 8)
    pre0 = (jnp.dot(ax.astype(bf16), w0_ref[...],
                    preferred_element_type=f32)
            + b_ref[0:1, 0:c0])                                      # (N, 16) hooked
    y0 = jnp.maximum(pre0, 0.0)                                      # ReLU

    # ---- layer 1: GCNConv(16 -> 32); (A @ Y0) @ W1 ----
    ay0 = jnp.dot(a, y0.astype(bf16), preferred_element_type=f32)    # (N, 16)
    h1 = (jnp.dot(ay0.astype(bf16), w1_ref[...],
                  preferred_element_type=f32)
          + b_ref[1:2, 0:c1])                                        # (N, 32)
    y1 = jnp.maximum(h1, 0.0)                                        # ReLU

    # ---- layer 2: GResidualLayer(GCNConv(32+16 -> 16), 'cat', dim=1) ----
    # cat([y1, pre0], 1) @ W2 == y1 @ W2[:32] + pre0 @ W2[32:]  (no concat)
    # C_in=48 > C_out=16, so do the channel contraction before A_hat.
    xw2 = (jnp.dot(y1.astype(bf16), w2a_ref[...], preferred_element_type=f32)
           + jnp.dot(pre0.astype(bf16), w2b_ref[...],
                     preferred_element_type=f32))                    # (N, 16)
    h2 = (jnp.dot(a, xw2.astype(bf16), preferred_element_type=f32)
          + b_ref[2:3, 0:c2])                                        # (N, 16)
    out_ref[...] = jnp.maximum(h2, 0.0).astype(out_ref.dtype)        # final ReLU


@jax.jit
def g_resnet_forward(x, a_hat, params):
    """G_ResNet.forward: y = x; for layer in net: y = relu(layer(y, edge_index))."""
    n = x.shape[0]
    c1 = params["w1"].shape[1]          # 32
    c_out = params["w2"].shape[1]       # 16
    bf16 = jnp.bfloat16

    # Split W2 so the residual concat becomes a sum of two matmuls.
    w2a = params["w2"][:c1, :]          # multiplies the layer-1 activation
    w2b = params["w2"][c1:, :]          # multiplies the hooked layer-0 pre-act

    # Pack the three biases into one tile-aligned (8, 128) f32 buffer.
    b_packed = jnp.zeros((8, 128), jnp.float32)
    b_packed = b_packed.at[0, :params["b0"].shape[0]].set(params["b0"])
    b_packed = b_packed.at[1, :params["b1"].shape[0]].set(params["b1"])
    b_packed = b_packed.at[2, :params["b2"].shape[0]].set(params["b2"])

    vmem = pl.BlockSpec(memory_space=pltpu.MemorySpace.VMEM)
    return pl.pallas_call(
        _g_resnet_kernel,
        out_shape=jax.ShapeDtypeStruct((n, c_out), jnp.float32),
        in_specs=[vmem] * 7,
        out_specs=vmem,
    )(
        a_hat.astype(bf16),
        x.astype(bf16),
        params["w0"].astype(bf16),
        params["w1"].astype(bf16),
        w2a.astype(bf16),
        w2b.astype(bf16),
        b_packed,
    )


# -----------------------------------------------------------------------------
# Plain-JAX glue: parameter init, normalized adjacency, f32 reference.
# -----------------------------------------------------------------------------
def glorot(key, shape):
    fan_in, fan_out = shape
    limit = jnp.sqrt(6.0 / (fan_in + fan_out))
    return jax.random.uniform(key, shape, jnp.float32, -limit, limit)


def normalized_adjacency(edge_index, num_nodes):
    src, dst = edge_index
    a = jnp.zeros((num_nodes, num_nodes), jnp.float32)
    a = a.at[dst, src].set(1.0)                       # messages flow src -> dst
    a = a + jnp.eye(num_nodes, dtype=jnp.float32)     # self loops
    deg = a.sum(axis=1)
    d_inv_sqrt = jnp.where(deg > 0, 1.0 / jnp.sqrt(deg), 0.0)
    return d_inv_sqrt[:, None] * a * d_inv_sqrt[None, :]


def g_resnet_reference(x, a_hat, params):
    """Pure-JAX f32 reference with identical semantics."""
    pre0 = a_hat @ (x @ params["w0"]) + params["b0"]
    y0 = jnp.maximum(pre0, 0.0)
    y1 = jnp.maximum(a_hat @ (y0 @ params["w1"]) + params["b1"], 0.0)
    y_in = jnp.concatenate([y1, pre0], axis=1)
    return jnp.maximum(a_hat @ (y_in @ params["w2"]) + params["b2"], 0.0)


if __name__ == "__main__":
    key = jax.random.PRNGKey(0)
    k = jax.random.split(key, 4)

    N, C_IN = 16, 8                  # 16 graph nodes, 8 input features
    OUT_CHANNELS = [16, 32, 16]      # adjacency={2: [0]} -> layer2 in = 32 + 16

    # deterministic input node features
    x = jax.random.normal(k[0], (N, C_IN), jnp.float32)

    # deterministic bidirectional ring graph
    src = jnp.arange(N)
    dst = (src + 1) % N
    edge_index = jnp.stack(
        [jnp.concatenate([src, dst]), jnp.concatenate([dst, src])]
    )
    a_hat = normalized_adjacency(edge_index, N)

    params = {
        "w0": glorot(k[1], (C_IN, OUT_CHANNELS[0])),
        "b0": jnp.zeros((OUT_CHANNELS[0],), jnp.float32),
        "w1": glorot(k[2], (OUT_CHANNELS[0], OUT_CHANNELS[1])),
        "b1": jnp.zeros((OUT_CHANNELS[1],), jnp.float32),
        "w2": glorot(k[3], (OUT_CHANNELS[1] + OUT_CHANNELS[0], OUT_CHANNELS[2])),
        "b2": jnp.zeros((OUT_CHANNELS[2],), jnp.float32),
    }

    y = g_resnet_forward(x, a_hat, params)
    jax.block_until_ready(y)
    assert y.shape == (N, OUT_CHANNELS[-1])

    # sanity check vs f32 reference (kernel uses bf16 MXU inputs -> loose tol)
    y_ref = g_resnet_reference(x, a_hat, params)
    assert bool(jnp.allclose(y, y_ref, atol=0.2, rtol=0.2)), (
        float(jnp.max(jnp.abs(y - y_ref))))

    print("KERNEL_OK")
</pallas_src>

<mosaic_0001>
module attributes {stable_mosaic.version = 11 : i64} {
  func.func @_g_resnet_kernel(%arg0: memref<16x16xbf16, #tpu.memory_space<vmem>>, %arg1: memref<16x8xbf16, #tpu.memory_space<vmem>>, %arg2: memref<8x16xbf16, #tpu.memory_space<vmem>>, %arg3: memref<16x32xbf16, #tpu.memory_space<vmem>>, %arg4: memref<32x16xbf16, #tpu.memory_space<vmem>>, %arg5: memref<16x16xbf16, #tpu.memory_space<vmem>>, %arg6: memref<8x128xf32, #tpu.memory_space<vmem>>, %arg7: memref<16x16xf32, #tpu.memory_space<vmem>>) attributes {dimension_semantics = [], scalar_prefetch = 0 : i64, scratch_operands = 0 : i64, tpu.core_type = #tpu.core_type<tc>} {
    %c0 = arith.constant 0 : index
    %c0_0 = arith.constant 0 : index
    %0 = vector.load %arg0[%c0, %c0_0] : memref<16x16xbf16, #tpu.memory_space<vmem>>, vector<16x16xbf16>
    %c0_1 = arith.constant 0 : index
    %c0_2 = arith.constant 0 : index
    %1 = vector.load %arg1[%c0_1, %c0_2] : memref<16x8xbf16, #tpu.memory_space<vmem>>, vector<16x8xbf16>
    %cst = arith.constant dense<0.000000e+00> : vector<16x8xf32>
    %2 = tpu.matmul %0, %1, %cst {dimension_numbers = #tpu.dot_dimension_numbers<[1], [0], [0], [1], [0, 0, 1, 1], [], []>} : vector<16x16xbf16>, vector<16x8xbf16>, vector<16x8xf32> -> vector<16x8xf32>
    %3 = arith.truncf %2 : vector<16x8xf32> to vector<16x8xbf16>
    %c0_3 = arith.constant 0 : index
    %c0_4 = arith.constant 0 : index
    %4 = vector.load %arg2[%c0_3, %c0_4] : memref<8x16xbf16, #tpu.memory_space<vmem>>, vector<8x16xbf16>
    %cst_5 = arith.constant dense<0.000000e+00> : vector<16x16xf32>
    %5 = tpu.matmul %3, %4, %cst_5 {dimension_numbers = #tpu.dot_dimension_numbers<[1], [0], [0], [1], [0, 0, 1, 1], [], []>} : vector<16x8xbf16>, vector<8x16xbf16>, vector<16x16xf32> -> vector<16x16xf32>
    %c0_6 = arith.constant 0 : index
    %c0_7 = arith.constant 0 : index
    %6 = vector.load %arg6[%c0_6, %c0_7] : memref<8x128xf32, #tpu.memory_space<vmem>>, vector<1x16xf32>
    %7 = vector.broadcast %6 : vector<1x16xf32> to vector<16x16xf32>
    %8 = arith.addf %5, %7 : vector<16x16xf32>
    %cst_8 = arith.constant 0.000000e+00 : f32
    %9 = vector.broadcast %cst_8 : f32 to vector<16x16xf32>
    %10 = arith.maximumf %8, %9 : vector<16x16xf32>
    %11 = arith.truncf %10 : vector<16x16xf32> to vector<16x16xbf16>
    %cst_9 = arith.constant dense<0.000000e+00> : vector<16x16xf32>
    %12 = tpu.matmul %0, %11, %cst_9 {dimension_numbers = #tpu.dot_dimension_numbers<[1], [0], [0], [1], [0, 0, 1, 1], [], []>} : vector<16x16xbf16>, vector<16x16xbf16>, vector<16x16xf32> -> vector<16x16xf32>
    %13 = arith.truncf %12 : vector<16x16xf32> to vector<16x16xbf16>
    %c0_10 = arith.constant 0 : index
    %c0_11 = arith.constant 0 : index
    %14 = vector.load %arg3[%c0_10, %c0_11] : memref<16x32xbf16, #tpu.memory_space<vmem>>, vector<16x32xbf16>
    %cst_12 = arith.constant dense<0.000000e+00> : vector<16x32xf32>
    %15 = tpu.matmul %13, %14, %cst_12 {dimension_numbers = #tpu.dot_dimension_numbers<[1], [0], [0], [1], [0, 0, 1, 1], [], []>} : vector<16x16xbf16>, vector<16x32xbf16>, vector<16x32xf32> -> vector<16x32xf32>
    %c1 = arith.constant 1 : index
    %c0_13 = arith.constant 0 : index
    %16 = vector.load %arg6[%c1, %c0_13] : memref<8x128xf32, #tpu.memory_space<vmem>>, vector<1x32xf32>
    %17 = vector.broadcast %16 : vector<1x32xf32> to vector<16x32xf32>
    %18 = arith.addf %15, %17 : vector<16x32xf32>
    %cst_14 = arith.constant 0.000000e+00 : f32
    %19 = vector.broadcast %cst_14 : f32 to vector<16x32xf32>
    %20 = arith.maximumf %18, %19 : vector<16x32xf32>
    %21 = arith.truncf %20 : vector<16x32xf32> to vector<16x32xbf16>
    %c0_15 = arith.constant 0 : index
    %c0_16 = arith.constant 0 : index
    %22 = vector.load %arg4[%c0_15, %c0_16] : memref<32x16xbf16, #tpu.memory_space<vmem>>, vector<32x16xbf16>
    %cst_17 = arith.constant dense<0.000000e+00> : vector<16x16xf32>
    %23 = tpu.matmul %21, %22, %cst_17 {dimension_numbers = #tpu.dot_dimension_numbers<[1], [0], [0], [1], [0, 0, 1, 1], [], []>} : vector<16x32xbf16>, vector<32x16xbf16>, vector<16x16xf32> -> vector<16x16xf32>
    %24 = arith.truncf %8 : vector<16x16xf32> to vector<16x16xbf16>
    %c0_18 = arith.constant 0 : index
    %c0_19 = arith.constant 0 : index
    %25 = vector.load %arg5[%c0_18, %c0_19] : memref<16x16xbf16, #tpu.memory_space<vmem>>, vector<16x16xbf16>
    %cst_20 = arith.constant dense<0.000000e+00> : vector<16x16xf32>
    %26 = tpu.matmul %24, %25, %cst_20 {dimension_numbers = #tpu.dot_dimension_numbers<[1], [0], [0], [1], [0, 0, 1, 1], [], []>} : vector<16x16xbf16>, vector<16x16xbf16>, vector<16x16xf32> -> vector<16x16xf32>
    %27 = arith.addf %23, %26 : vector<16x16xf32>
    %28 = arith.truncf %27 : vector<16x16xf32> to vector<16x16xbf16>
    %cst_21 = arith.constant dense<0.000000e+00> : vector<16x16xf32>
    %29 = tpu.matmul %0, %28, %cst_21 {dimension_numbers = #tpu.dot_dimension_numbers<[1], [0], [0], [1], [0, 0, 1, 1], [], []>} : vector<16x16xbf16>, vector<16x16xbf16>, vector<16x16xf32> -> vector<16x16xf32>
    %c2 = arith.constant 2 : index
    %c0_22 = arith.constant 0 : index
    %30 = vector.load %arg6[%c2, %c0_22] : memref<8x128xf32, #tpu.memory_space<vmem>>, vector<1x16xf32>
    %31 = vector.broadcast %30 : vector<1x16xf32> to vector<16x16xf32>
    %32 = arith.addf %29, %31 : vector<16x16xf32>
    %cst_23 = arith.constant 0.000000e+00 : f32
    %33 = vector.broadcast %cst_23 : f32 to vector<16x16xf32>
    %34 = arith.maximumf %32, %33 : vector<16x16xf32>
    %c0_24 = arith.constant 0 : index
    %c0_25 = arith.constant 0 : index
    %35 = vector.load %arg7[%c0_24, %c0_25] : memref<16x16xf32, #tpu.memory_space<vmem>>, vector<16x16xf32>
    tpu.vector_store %arg7[%c0_24, %c0_25], %34 {strides = array<i32>} : memref<16x16xf32, #tpu.memory_space<vmem>>, vector<16x16xf32>,
    return
  }
}

</mosaic_0001>

<llo_original>
// kernel: g_resnet_forward.1
$region0: #{g_resnet_forward.1}
  #allocation0 [shape = 'u32[]', space=smem, size = 0x4, offset = 0x4, fixed_abs, tag = 'smem constant byte address 0x4 - core index']
  #allocation1 [shape = 'u32[144,128]{1,0:T(1,128)}', space=vmem, size = 0x12000, scoped, tag = 'internal scratch']
  %s0 = inlined_call_operand.vmem [shape: bf16[16,16], index: 0, kind: input, shape index: {}]
  %s1 = inlined_call_operand.vmem [shape: bf16[16,8], index: 1, kind: input, shape index: {}]
  %s2 = inlined_call_operand.vmem [shape: bf16[8,16], index: 2, kind: input, shape index: {}]
  %s3 = inlined_call_operand.vmem [shape: bf16[16,32], index: 3, kind: input, shape index: {}]
  %s4 = inlined_call_operand.vmem [shape: bf16[32,16], index: 4, kind: input, shape index: {}]
  %s5 = inlined_call_operand.vmem [shape: bf16[16,16], index: 5, kind: input, shape index: {}]
  %s6 = inlined_call_operand.vmem [shape: f32[8,128], index: 6, kind: input, shape index: {}]
  %s7 = inlined_call_operand.hbm [shape: f32[16,16], index: 7, kind: output, shape index: {}]
  %s8 = sld [smem:[#allocation0]]
  $region38: #{g_resnet_forward.1} parent=0
    _
  %s10 = ssub.s32 1, %s8
  %s11 = scalar_select 0, %s10, %s8
  $region1: #{g_resnet_forward.1} parent=0
    #allocation2 [shape = 'u8[8192]{0}', space=vmem, size = 0x2000, scoped, tag = 'output window, operand 0, single buffered']
    #allocation3 [shape = 's32[1]{0}', space=sflag, size = 0x4, scoped, tag = 'scoped memory for g_resnet_forward.1']
    %12 = vsyncpa [#allocation3], 0
    // Predicated region
    $region2: #{g_resnet_forward.1} parent=1 // pred_check
      _
    $region3: #{g_resnet_forward.1} parent=1 // pred_check_branch
      %14 = sbr.rel (0) target = $region5
    $region4: #{g_resnet_forward.1} parent=1 // pred_region
      _
    $region5: #{g_resnet_forward.1} parent=1 // pred_fallthru
      _
    // Predicated region
    $region6: #{g_resnet_forward.1} parent=1 // pred_check
      _
    $region7: #{g_resnet_forward.1} parent=1 // pred_check_branch
      %16 = sbr.rel (0) target = $region9
    $region8: #{g_resnet_forward.1} parent=1 // pred_region
      _
    $region9: #{g_resnet_forward.1} parent=1 // pred_fallthru
      _
    // Predicated region
    $region10: #{g_resnet_forward.1} parent=1 // pred_check
      _
    $region11: #{g_resnet_forward.1} parent=1 // pred_check_branch
      %18 = sbr.rel (0) target = $region13
    $region12: #{g_resnet_forward.1} parent=1 // pred_region
      _
    $region13: #{g_resnet_forward.1} parent=1 // pred_fallthru
      _
    // Predicated region
    $region14: #{g_resnet_forward.1} parent=1 // pred_check
      _
    $region15: #{g_resnet_forward.1} parent=1 // pred_check_branch
      %20 = sbr.rel (0) target = $region17
    $region16: #{g_resnet_forward.1} parent=1 // pred_region
      _
    $region17: #{g_resnet_forward.1} parent=1 // pred_fallthru
      _
    // Predicated region
    $region18: #{g_resnet_forward.1} parent=1 // pred_check
      _
    $region19: #{g_resnet_forward.1} parent=1 // pred_check_branch
      %22 = sbr.rel (0) target = $region21
    $region20: #{g_resnet_forward.1} parent=1 // pred_region
      _
    $region21: #{g_resnet_forward.1} parent=1 // pred_fallthru
      _
    // Predicated region
    $region22: #{g_resnet_forward.1} parent=1 // pred_check
      _
    $region23: #{g_resnet_forward.1} parent=1 // pred_check_branch
      %24 = sbr.rel (0) target = $region25
    $region24: #{g_resnet_forward.1} parent=1 // pred_region
      _
    $region25: #{g_resnet_forward.1} parent=1 // pred_fallthru
      _
    // Predicated region
    $region26: #{g_resnet_forward.1} parent=1 // pred_check
      _
    $region27: #{g_resnet_forward.1} parent=1 // pred_check_branch
      %26 = sbr.rel (0) target = $region29
    $region28: #{g_resnet_forward.1} parent=1 // pred_region
      _
    $region29: #{g_resnet_forward.1} parent=1 // pred_fallthru
      _
    %v28 = vld [vmem:[%s0] sm:$0xf]
    %v29 = vld [vmem:[%s0 + $0x4] sm:$0xf]
    %v30 = vld [vmem:[%s1] sm:$0xf]
    %v31 = vld [vmem:[%s1 + $0x4] sm:$0xf]
    %v34 = vunpack.c.l.b16 %v28
    %v35 = vunpack.c.l.b16 %v29
    %v36 = vpack.c.b16 %v35, %v34
    %v39 = vunpack.c.l.b16 %v30
    %v40 = vunpack.c.l.b16 %v31
    %v41 = vpack.c.b16 %v40, %v39
    %vm43 = vcmask 130048
    %v45 = vsel %vm43, %v36, 0
    %47 = vmatprep.subr.bf16.mxu0 0
    %48 = vmatpush1.bf16.msra.mxu0 %v41
    %49 = vmatprep.subr.bf16.mxu0 0
    %50 = vmatpush1.bf16.msra.mxu0 0
    %51 = vmatprep.subr.bf16.mxu0 0
    %52 = vmatpush1.bf16.msra.mxu0 0
    %53 = vmatprep.subr.bf16.mxu0 0
    %54 = vmatpush1.bf16.msra.mxu0 0
    %55 = vmatprep.subr.bf16.mxu0 0
    %56 = vmatpush1.bf16.msra.mxu0 0
    %57 = vmatprep.subr.bf16.mxu0 0
    %58 = vmatpush1.bf16.msra.mxu0 0
    %59 = vmatprep.subr.bf16.mxu0 0
    %60 = vmatpush1.bf16.msra.mxu0 0
    %61 = vmatprep.subr.bf16.mxu0 0
    %62 = vmatpush1.bf16.msra.mxu0 0
    %63 = vmatprep.subr.bf16.mxu0 0
    %64 = vmatpush1.bf16.msra.mxu0 0
    %65 = vmatprep.subr.bf16.mxu0 0
    %66 = vmatpush1.bf16.msra.mxu0 0
    %67 = vmatprep.subr.bf16.mxu0 0
    %68 = vmatpush1.bf16.msra.mxu0 0
    %69 = vmatprep.subr.bf16.mxu0 0
    %70 = vmatpush1.bf16.msra.mxu0 0
    %71 = vmatprep.subr.bf16.mxu0 0
    %72 = vmatpush1.bf16.msra.mxu0 0
    %73 = vmatprep.subr.bf16.mxu0 0
    %74 = vmatpush1.bf16.msra.mxu0 0
    %75 = vmatprep.subr.bf16.mxu0 0
    %76 = vmatpush1.bf16.msra.mxu0 0
    %77 = vmatprep.subr.bf16.mxu0 0
    %78 = vmatpush1.bf16.msra.mxu0 0
    %79 = vmatprep.mubr.bf16.mxu0 0
    %80 = vmatmul.mubr.bf16.gmra.mrb[0].mxu0 %v45
    %v81 = vpop.f32.mrb[0].mxu0
    %v82 = vadd.f32 0.0, %v81
    %v83 = vpop.f32.mrb[0].mxu0
    %v84 = vpop.f32.mrb[0].mxu0
    %v85 = vadd.f32 0.0, %v84
    %v86 = vpop.f32.mrb[0].mxu0
    %87 = vdwg.mxu0
    %v88 = vpack.c.bf16 %v85, %v82
    %v89 = vld [vmem:[%s2] sm:$0xf]
    %v90 = vld [vmem:[%s6] sm:$0x1]
    %v91 = vlaneseq
    %v92 = vshrl.u32 %v91, 7
    %v93 = vsub.s32 0, %v92
    %v94 = vrot.slane %v90, %v93
    %vm95 = vcmask 64512
    %v97 = vsel %vm95, %v88, 0
    %vm99 = vcmask 1043456
    %v101 = vsel %vm99, %v89, 0
    %103 = vmatprep.subr.bf16.mxu0 0
    %104 = vmatpush1.bf16.msra.mxu0 %v101
    %105 = vmatprep.subr.bf16.mxu0 0
    %106 = vmatpush1.bf16.msra.mxu0 0
    %107 = vmatprep.subr.bf16.mxu0 0
    %108 = vmatpush1.bf16.msra.mxu0 0
    %109 = vmatprep.subr.bf16.mxu0 0
    %110 = vmatpush1.bf16.msra.mxu0 0
    %111 = vmatprep.subr.bf16.mxu0 0
    %112 = vmatpush1.bf16.msra.mxu0 0
    %113 = vmatprep.subr.bf16.mxu0 0
    %114 = vmatpush1.bf16.msra.mxu0 0
    %115 = vmatprep.subr.bf16.mxu0 0
    %116 = vmatpush1.bf16.msra.mxu0 0
    %117 = vmatprep.subr.bf16.mxu0 0
    %118 = vmatpush1.bf16.msra.mxu0 0
    %119 = vmatprep.subr.bf16.mxu0 0
    %120 = vmatpush1.bf16.msra.mxu0 0
    %121 = vmatprep.subr.bf16.mxu0 0
    %122 = vmatpush1.bf16.msra.mxu0 0
    %123 = vmatprep.subr.bf16.mxu0 0
    %124 = vmatpush1.bf16.msra.mxu0 0
    %125 = vmatprep.subr.bf16.mxu0 0
    %126 = vmatpush1.bf16.msra.mxu0 0
    %127 = vmatprep.subr.bf16.mxu0 0
    %128 = vmatpush1.bf16.msra.mxu0 0
    %129 = vmatprep.subr.bf16.mxu0 0
    %130 = vmatpush1.bf16.msra.mxu0 0
    %131 = vmatprep.subr.bf16.mxu0 0
    %132 = vmatpush1.bf16.msra.mxu0 0
    %133 = vmatprep.subr.bf16.mxu0 0
    %134 = vmatpush1.bf16.msra.mxu0 0
    %135 = vmatprep.mubr.bf16.mxu0 0
    %136 = vmatmul.mubr.bf16.gmra.mrb[0].mxu0 %v97
    %v137 = vpop.f32.mrb[0].mxu0
    %v138 = vadd.f32 %v94, %v137
    %v139 = vpop.f32.mrb[0].mxu0
    %v140 = vpop.f32.mrb[0].mxu0
    %v141 = vadd.f32 %v94, %v140
    %v142 = vpop.f32.mrb[0].mxu0
    %143 = vdwg.mxu0
    %v144 = vmax.f32 %v138, 0.0
    %v145 = vmax.f32 %v141, 0.0
    %v146 = vpack.c.bf16 %v145, %v144
    %147 = vmatprep.subr.bf16.mxu0 0
    %148 = vmatpush1.bf16.msra.mxu0 %v146
    %149 = vmatprep.subr.bf16.mxu0 0
    %150 = vmatpush1.bf16.msra.mxu0 0
    %151 = vmatprep.subr.bf16.mxu0 0
    %152 = vmatpush1.bf16.msra.mxu0 0
    %153 = vmatprep.subr.bf16.mxu0 0
    %154 = vmatpush1.bf16.msra.mxu0 0
    %155 = vmatprep.subr.bf16.mxu0 0
    %156 = vmatpush1.bf16.msra.mxu0 0
    %157 = vmatprep.subr.bf16.mxu0 0
    %158 = vmatpush1.bf16.msra.mxu0 0
    %159 = vmatprep.subr.bf16.mxu0 0
    %160 = vmatpush1.bf16.msra.mxu0 0
    %161 = vmatprep.subr.bf16.mxu0 0
    %162 = vmatpush1.bf16.msra.mxu0 0
    %163 = vmatprep.subr.bf16.mxu0 0
    %164 = vmatpush1.bf16.msra.mxu0 0
    %165 = vmatprep.subr.bf16.mxu0 0
    %166 = vmatpush1.bf16.msra.mxu0 0
    %167 = vmatprep.subr.bf16.mxu0 0
    %168 = vmatpush1.bf16.msra.mxu0 0
    %169 = vmatprep.subr.bf16.mxu0 0
    %170 = vmatpush1.bf16.msra.mxu0 0
    %171 = vmatprep.subr.bf16.mxu0 0
    %172 = vmatpush1.bf16.msra.mxu0 0
    %173 = vmatprep.subr.bf16.mxu0 0
    %174 = vmatpush1.bf16.msra.mxu0 0
    %175 = vmatprep.subr.bf16.mxu0 0
    %176 = vmatpush1.bf16.msra.mxu0 0
    %177 = vmatprep.subr.bf16.mxu0 0
    %178 = vmatpush1.bf16.msra.mxu0 0
    %179 = vmatprep.mubr.bf16.mxu0 0
    %180 = vmatmul.mubr.bf16.gmra.mrb[0].mxu0 %v45
    %v181 = vpop.f32.mrb[0].mxu0
    %v182 = vadd.f32 0.0, %v181
    %v183 = vpop.f32.mrb[0].mxu0
    %v184 = vpop.f32.mrb[0].mxu0
    %v185 = vadd.f32 0.0, %v184
    %v186 = vpop.f32.mrb[0].mxu0
    %187 = vdwg.mxu0
    %v188 = vpack.c.bf16 %v185, %v182
    %v189 = vld [vmem:[%s3] sm:$0xf]
    %v190 = vld [vmem:[%s3 + $0x4] sm:$0xf]
    %v191 = vld [vmem:[%s6 + $0x1] sm:$0x1]
    %v192 = vlaneseq
    %v193 = vshrl.u32 %v192, 7
    %v194 = vsub.s32 0, %v193
    %v195 = vrot.slane %v191, %v194
    %v198 = vunpack.c.l.b16 %v189
    %v199 = vunpack.c.l.b16 %v190
    %v200 = vpack.c.b16 %v199, %v198
    %v203 = vsel %vm43, %v188, 0
    %205 = vmatprep.subr.bf16.mxu0 0
    %206 = vmatpush1.bf16.msra.mxu0 %v200
    %207 = vmatprep.subr.bf16.mxu0 0
    %208 = vmatpush1.bf16.msra.mxu0 0
    %209 = vmatprep.subr.bf16.mxu0 0
    %210 = vmatpush1.bf16.msra.mxu0 0
    %211 = vmatprep.subr.bf16.mxu0 0
    %212 = vmatpush1.bf16.msra.mxu0 0
    %213 = vmatprep.subr.bf16.mxu0 0
    %214 = vmatpush1.bf16.msra.mxu0 0
    %215 = vmatprep.subr.bf16.mxu0 0
    %216 = vmatpush1.bf16.msra.mxu0 0
    %217 = vmatprep.subr.bf16.mxu0 0
    %218 = vmatpush1.bf16.msra.mxu0 0
    %219 = vmatprep.subr.bf16.mxu0 0
    %220 = vmatpush1.bf16.msra.mxu0 0
    %221 = vmatprep.subr.bf16.mxu0 0
    %222 = vmatpush1.bf16.msra.mxu0 0
    %223 = vmatprep.subr.bf16.mxu0 0
    %224 = vmatpush1.bf16.msra.mxu0 0
    %225 = vmatprep.subr.bf16.mxu0 0
    %226 = vmatpush1.bf16.msra.mxu0 0
    %227 = vmatprep.subr.bf16.mxu0 0
    %228 = vmatpush1.bf16.msra.mxu0 0
    %229 = vmatprep.subr.bf16.mxu0 0
    %230 = vmatpush1.bf16.msra.mxu0 0
    %231 = vmatprep.subr.bf16.mxu0 0
    %232 = vmatpush1.bf16.msra.mxu0 0
    %233 = vmatprep.subr.bf16.mxu0 0
    %234 = vmatpush1.bf16.msra.mxu0 0
    %235 = vmatprep.subr.bf16.mxu0 0
    %236 = vmatpush1.bf16.msra.mxu0 0
    %237 = vmatprep.mubr.bf16.mxu0 0
    %238 = vmatmul.mubr.bf16.gmra.mrb[0].mxu0 %v203
    %v239 = vpop.f32.mrb[0].mxu0
    %v240 = vadd.f32 %v195, %v239
    %v241 = vpop.f32.mrb[0].mxu0
    %v242 = vpop.f32.mrb[0].mxu0
    %v243 = vadd.f32 %v195, %v242
    %v244 = vpop.f32.mrb[0].mxu0
    %245 = vdwg.mxu0
    %v246 = vmax.f32 %v240, 0.0
    %v247 = vmax.f32 %v243, 0.0
    %v248 = vpack.c.bf16 %v247, %v246
    %v249 = vld [vmem:[%s4] sm:$0xf]
    %v250 = vld [vmem:[%s4 + $0x4] sm:$0xf]
    %v251 = vld [vmem:[%s4 + $0x8] sm:$0xf]
    %v252 = vld [vmem:[%s4 + $0xc] sm:$0xf]
    %v253 = vpack.c.bf16 %v141, %v138
    %v254 = vld [vmem:[%s5] sm:$0xf]
    %v255 = vld [vmem:[%s5 + $0x4] sm:$0xf]
    %v258 = vunpack.c.l.b16 %v254
    %v259 = vunpack.c.l.b16 %v255
    %v260 = vpack.c.b16 %v259, %v258
    %v263 = vsel %vm43, %v253, 0
    %265 = vmatprep.subr.bf16.mxu0 0
    %266 = vmatpush1.bf16.msra.mxu0 %v260
    %267 = vmatprep.subr.bf16.mxu0 0
    %268 = vmatpush1.bf16.msra.mxu0 0
    %269 = vmatprep.subr.bf16.mxu0 0
    %270 = vmatpush1.bf16.msra.mxu0 0
    %271 = vmatprep.subr.bf16.mxu0 0
    %272 = vmatpush1.bf16.msra.mxu0 0
    %273 = vmatprep.subr.bf16.mxu0 0
    %274 = vmatpush1.bf16.msra.mxu0 0
    %275 = vmatprep.subr.bf16.mxu0 0
    %276 = vmatpush1.bf16.msra.mxu0 0
    %277 = vmatprep.subr.bf16.mxu0 0
    %278 = vmatpush1.bf16.msra.mxu0 0
    %279 = vmatprep.subr.bf16.mxu0 0
    %280 = vmatpush1.bf16.msra.mxu0 0
    %281 = vmatprep.subr.bf16.mxu0 0
    %282 = vmatpush1.bf16.msra.mxu0 0
    %283 = vmatprep.subr.bf16.mxu0 0
    %284 = vmatpush1.bf16.msra.mxu0 0
    %285 = vmatprep.subr.bf16.mxu0 0
    %286 = vmatpush1.bf16.msra.mxu0 0
    %287 = vmatprep.subr.bf16.mxu0 0
    %288 = vmatpush1.bf16.msra.mxu0 0
    %289 = vmatprep.subr.bf16.mxu0 0
    %290 = vmatpush1.bf16.msra.mxu0 0
    %291 = vmatprep.subr.bf16.mxu0 0
    %292 = vmatpush1.bf16.msra.mxu0 0
    %293 = vmatprep.subr.bf16.mxu0 0
    %294 = vmatpush1.bf16.msra.mxu0 0
    %295 = vmatprep.subr.bf16.mxu0 0
    %296 = vmatpush1.bf16.msra.mxu0 0
    %297 = vmatprep.mubr.bf16.mxu0 0
    %298 = vmatmul.mubr.bf16.gmra.mrb[0].mxu0 %v263
    %v299 = vpop.f32.mrb[0].mxu0
    %v300 = vadd.f32 0.0, %v299
    %v301 = vpop.f32.mrb[0].mxu0
    %v302 = vpop.f32.mrb[0].mxu0
    %v303 = vadd.f32 0.0, %v302
    %v304 = vpop.f32.mrb[0].mxu0
    %305 = vdwg.mxu0
    %v310 = vunpack.c.l.b16 %v249
    %v311 = vunpack.c.l.b16 %v250
    %v312 = vunpack.c.l.b16 %v251
    %v313 = vunpack.c.l.b16 %v252
    %v314 = vpack.c.b16 %v311, %v310
    %v315 = vpack.c.b16 %v313, %v312
    %vm318 = vcmask 261120
    %v320 = vsel %vm318, %v248, 0
    %322 = vmatprep.subr.bf16.mxu0 0
    %323 = vmatpush1.bf16.msra.mxu0 %v314
    %324 = vmatprep.subr.bf16.mxu0 0
    %325 = vmatpush1.bf16.msra.mxu0 %v315
    %326 = vmatprep.subr.bf16.mxu0 0
    %327 = vmatpush1.bf16.msra.mxu0 0
    %328 = vmatprep.subr.bf16.mxu0 0
    %329 = vmatpush1.bf16.msra.mxu0 0
    %330 = vmatprep.subr.bf16.mxu0 0
    %331 = vmatpush1.bf16.msra.mxu0 0
    %332 = vmatprep.subr.bf16.mxu0 0
    %333 = vmatpush1.bf16.msra.mxu0 0
    %334 = vmatprep.subr.bf16.mxu0 0
    %335 = vmatpush1.bf16.msra.mxu0 0
    %336 = vmatprep.subr.bf16.mxu0 0
    %337 = vmatpush1.bf16.msra.mxu0 0
    %338 = vmatprep.subr.bf16.mxu0 0
    %339 = vmatpush1.bf16.msra.mxu0 0
    %340 = vmatprep.subr.bf16.mxu0 0
    %341 = vmatpush1.bf16.msra.mxu0 0
    %342 = vmatprep.subr.bf16.mxu0 0
    %343 = vmatpush1.bf16.msra.mxu0 0
    %344 = vmatprep.subr.bf16.mxu0 0
    %345 = vmatpush1.bf16.msra.mxu0 0
    %346 = vmatprep.subr.bf16.mxu0 0
    %347 = vmatpush1.bf16.msra.mxu0 0
    %348 = vmatprep.subr.bf16.mxu0 0
    %349 = vmatpush1.bf16.msra.mxu0 0
    %350 = vmatprep.subr.bf16.mxu0 0
    %351 = vmatpush1.bf16.msra.mxu0 0
    %352 = vmatprep.subr.bf16.mxu0 0
    %353 = vmatpush1.bf16.msra.mxu0 0
    %354 = vmatprep.mubr.bf16.mxu0 0
    %355 = vmatmul.mubr.bf16.gmra.mrb[0].mxu0 %v320
    %v356 = vpop.f32.mrb[0].mxu0
    %v357 = vadd.f32 %v300, %v356
    %v358 = vpop.f32.mrb[0].mxu0
    %v359 = vpop.f32.mrb[0].mxu0
    %v360 = vadd.f32 %v303, %v359
    %v361 = vpop.f32.mrb[0].mxu0
    %362 = vdwg.mxu0
    %v363 = vpack.c.bf16 %v360, %v357
    %v364 = vld [vmem:[%s6 + $0x2] sm:$0x1]
    %v365 = vlaneseq
    %v366 = vshrl.u32 %v365, 7
    %v367 = vsub.s32 0, %v366
    %v368 = vrot.slane %v364, %v367
    %369 = vmatprep.subr.bf16.mxu0 0
    %370 = vmatpush1.bf16.msra.mxu0 %v363
    %371 = vmatprep.subr.bf16.mxu0 0
    %372 = vmatpush1.bf16.msra.mxu0 0
    %373 = vmatprep.subr.bf16.mxu0 0
    %374 = vmatpush1.bf16.msra.mxu0 0
    %375 = vmatprep.subr.bf16.mxu0 0
    %376 = vmatpush1.bf16.msra.mxu0 0
    %377 = vmatprep.subr.bf16.mxu0 0
    %378 = vmatpush1.bf16.msra.mxu0 0
    %379 = vmatprep.subr.bf16.mxu0 0
    %380 = vmatpush1.bf16.msra.mxu0 0
    %381 = vmatprep.subr.bf16.mxu0 0
    %382 = vmatpush1.bf16.msra.mxu0 0
    %383 = vmatprep.subr.bf16.mxu0 0
    %384 = vmatpush1.bf16.msra.mxu0 0
    %385 = vmatprep.subr.bf16.mxu0 0
    %386 = vmatpush1.bf16.msra.mxu0 0
    %387 = vmatprep.subr.bf16.mxu0 0
    %388 = vmatpush1.bf16.msra.mxu0 0
    %389 = vmatprep.subr.bf16.mxu0 0
    %390 = vmatpush1.bf16.msra.mxu0 0
    %391 = vmatprep.subr.bf16.mxu0 0
    %392 = vmatpush1.bf16.msra.mxu0 0
    %393 = vmatprep.subr.bf16.mxu0 0
    %394 = vmatpush1.bf16.msra.mxu0 0
    %395 = vmatprep.subr.bf16.mxu0 0
    %396 = vmatpush1.bf16.msra.mxu0 0
    %397 = vmatprep.subr.bf16.mxu0 0
    %398 = vmatpush1.bf16.msra.mxu0 0
    %399 = vmatprep.subr.bf16.mxu0 0
    %400 = vmatpush1.bf16.msra.mxu0 0
    %401 = vmatprep.mubr.bf16.mxu0 0
    %402 = vmatmul.mubr.bf16.gmra.mrb[0].mxu0 %v45
    %v403 = vpop.f32.mrb[0].mxu0
    %v404 = vadd.f32 %v368, %v403
    %v405 = vpop.f32.mrb[0].mxu0
    %v406 = vpop.f32.mrb[0].mxu0
    %v407 = vadd.f32 %v368, %v406
    %v408 = vpop.f32.mrb[0].mxu0
    %409 = vdwg.mxu0
    %v410 = vmax.f32 %v404, 0.0
    %v411 = vmax.f32 %v407, 0.0
    %412 = vst.msk [vmem:[#allocation2] sm:$0xff] %vm43, %v410
    %413 = vst.msk [vmem:[#allocation2 + $0x8] sm:$0xff] %vm43, %v411
    // Predicated region
    $region30: #{g_resnet_forward.1} parent=1 // pred_check
      _
    $region31: #{g_resnet_forward.1} parent=1 // pred_check_branch
      %415 = sbr.rel (0) target = $region33
    $region32: #{g_resnet_forward.1} parent=1 // pred_region
      %s417 = ssub.s32 256, 256
      %418 = vsyncadd [#allocation3], %s417
      %s419 = sshll.u32 [#allocation2], 4
      %s420 = int_to_ptr.vmem [resolvable:$true] %s419
      %425 = dma.vmem_to_hbm [thread:$0]  %s420, 256, %s7, [#allocation3], 128, 128, 8
    $region33: #{g_resnet_forward.1} parent=1 // pred_fallthru
      _
    // Predicated region
    $region34: #{g_resnet_forward.1} parent=1 // pred_check
      _
    $region35: #{g_resnet_forward.1} parent=1 // pred_check_branch
      %427 = sbr.rel (0) target = $region37
    $region36: #{g_resnet_forward.1} parent=1 // pred_region
      %428 = dma.done [#allocation3], 256
    $region37: #{g_resnet_forward.1} parent=1 // pred_fallthru
      _
    %429 = vsyncpa [#allocation3], 1

</llo_original>
